<compile_context>
chip_gen: v7x
topology: tpu7x:2x2x1
jax: 0.10.0
libtpu: 0.0.40
codegen_flags: <defaults>
</compile_context>

<pallas_src>
import functools

import jax
import jax.numpy as jnp
from jax import lax
from jax.experimental import pallas as pl
from jax.experimental.pallas import tpu as pltpu

LANES = 128
SUBLANES = 8
INNER_ROWS = 128            # rows per in-kernel compute chunk (16 f32 vregs / value)
MIN_TILE_ROWS = 512         # keep per-grid-step overhead small even on v7x HBM
MAX_TILE_ROWS = 8192        # (8192, 128) f32 block = 4 MiB per input
MIN_TILES_PER_SPLIT = 4     # keep both TensorCores busy on megacore parts
VMEM_LIMIT_BYTES = 32 * 1024 * 1024


def _num_splits():
    """2 on megacore parts (2 TensorCores per chip: v4 / v5p / v7x), else 1."""
    try:
        kind = jax.devices()[0].device_kind.lower()
    except Exception:
        return 2
    if any(s in kind for s in ("v5 lite", "v5lite", "v5e", "v6")):
        return 1            # single TensorCore: skip the split (minor, free win)
    return 2


def _focal_sum_kernel(x_ref, t_ref, out_ref, *, pos_weight, gamma, n_valid,
                      tile_rows, tiles_per_split):
    c = pl.program_id(0)            # split (megacore "parallel" axis)
    j = pl.program_id(1)            # tile within the split ("arbitrary" axis)

    @pl.when(j == 0)
    def _():
        out_ref[...] = jnp.zeros_like(out_ref)

    logical_blk = c * tiles_per_split + j
    block_base = logical_blk * (tile_rows * LANES)    # linear offset of this block

    inner_rows = min(INNER_ROWS, tile_rows)
    n_inner = tile_rows // inner_rows

    def accumulate(masked):
        if masked:
            rid = lax.broadcasted_iota(jnp.int32, (inner_rows, LANES), 0)
            lid = lax.broadcasted_iota(jnp.int32, (inner_rows, LANES), 1)
            offs = rid * LANES + lid                  # hoisted out of the loop

        def body(i, carry):
            r0 = pl.multiple_of(i * inner_rows, inner_rows)
            x = x_ref[pl.ds(r0, inner_rows), :].astype(jnp.float32)
            t = t_ref[pl.ds(r0, inner_rows), :].astype(jnp.float32)

            # Stable binary_cross_entropy_with_logits (PyTorch semantics):
            #   bce = (1-t)*x + (1 + (pw-1)*t) * (log1p(exp(-|x|)) + max(-x, 0))
            e = jnp.exp(-jnp.abs(x))                            # shared with sigmoid
            softplus_neg = jnp.log1p(e) + jnp.maximum(-x, 0.0)  # log(1 + exp(-x))
            if pos_weight == 1.0:
                bce = (1.0 - t) * x + softplus_neg
            else:
                bce = (1.0 - t) * x + (1.0 + (pos_weight - 1.0) * t) * softplus_neg

            # sigmoid(|x|) = 1/(1+exp(-|x|)); divide goes to the EUP slot.
            r = pl.reciprocal(1.0 + e, approx=True)
            sig = jnp.where(x >= 0, r, 1.0 - r)
            one_minus_pt = sig + t - 2.0 * sig * t              # == 1 - pt
            if gamma == 2.0:
                mod = one_minus_pt * one_minus_pt
            elif gamma == 1.0:
                mod = one_minus_pt
            elif gamma == 0.0:
                mod = jnp.ones_like(one_minus_pt)
            else:
                mod = jnp.maximum(one_minus_pt, 0.0) ** gamma
            f = mod * bce

            if masked:
                lin = (block_base + r0 * LANES) + offs
                f = jnp.where(lin < n_valid, f, 0.0)

            # (inner_rows,128) -> (8,128): pure VPU vreg adds, no XLU reduce.
            out_ref[...] += f.reshape(inner_rows // SUBLANES, SUBLANES, LANES).sum(axis=0)
            return carry

        lax.fori_loop(0, n_inner, body, 0)

    # Only the ragged-tail block / clamped duplicate blocks pay for the mask.
    fully_valid = block_base + tile_rows * LANES <= n_valid

    @pl.when(fully_valid)
    def _():
        accumulate(masked=False)

    @pl.when(jnp.logical_not(fully_valid))
    def _():
        accumulate(masked=True)


def _focal_elements(x, t, pos_weight, gamma):
    """Per-element focal loss in plain jnp (ragged tail + reference)."""
    x = x.astype(jnp.float32)
    t = t.astype(jnp.float32)
    log_weight = 1.0 + (pos_weight - 1.0) * t
    bce = (1.0 - t) * x + log_weight * (jnp.log1p(jnp.exp(-jnp.abs(x))) +
                                        jnp.maximum(-x, 0.0))
    sig = jax.nn.sigmoid(x)
    pt = sig * t + (1.0 - sig) * (1.0 - t)
    return (1.0 - pt) ** gamma * bce


def _pick_tile_rows(rows, n_split):
    # Big tiles to amortize per-step overhead, but keep >= MIN_TILES_PER_SPLIT
    # tiles per split so both TensorCores stay busy on megacore parts.
    target = pl.cdiv(rows, n_split * MIN_TILES_PER_SPLIT)
    tile_rows = max(MIN_TILE_ROWS, target)
    tile_rows = min(tile_rows, MAX_TILE_ROWS, rows)
    if tile_rows >= INNER_ROWS:
        tile_rows -= tile_rows % INNER_ROWS   # divisible by the inner compute chunk
    return max(tile_rows, SUBLANES)           # rows is always a multiple of 8


def focal_loss(inputs, targets, *, pos_weight=1.0, gamma=2.0):
    """FocalLoss(pos_weight, gamma, logits=True, reduction=True, weight=None).forward."""
    # TODO(synk): logits=False path, per-element `weight`, and reduction=False are
    # not implemented (module defaults: logits=True, weight=None, reduction=True).
    assert inputs.shape == targets.shape
    n_elem = int(inputs.size)
    pos_weight = float(pos_weight)
    gamma = float(gamma)

    x_flat = inputs.reshape(-1)
    t_flat = targets.reshape(-1)

    chunk = SUBLANES * LANES                       # 1024
    n_bulk = (n_elem // chunk) * chunk             # largest aligned prefix
    total = jnp.float32(0.0)

    if n_bulk > 0:
        rows = n_bulk // LANES
        x2 = x_flat[:n_bulk].reshape(rows, LANES)
        t2 = t_flat[:n_bulk].reshape(rows, LANES)

        n_split = _num_splits()
        tile_rows = _pick_tile_rows(rows, n_split)
        tiles_total = pl.cdiv(rows, tile_rows)
        tiles_per_split = pl.cdiv(tiles_total, n_split)

        def in_map(c, j):
            # Clamp so the DMA never targets a fully out-of-range block; the
            # in-kernel mask zeroes any duplicated / out-of-range contribution.
            return (jnp.minimum(c * tiles_per_split + j, tiles_total - 1), 0)

        kernel = functools.partial(
            _focal_sum_kernel,
            pos_weight=pos_weight, gamma=gamma, n_valid=int(n_bulk),
            tile_rows=int(tile_rows), tiles_per_split=int(tiles_per_split))

        partials = pl.pallas_call(
            kernel,
            out_shape=jax.ShapeDtypeStruct((n_split * SUBLANES, LANES), jnp.float32),
            grid_spec=pltpu.PrefetchScalarGridSpec(
                num_scalar_prefetch=0,
                grid=(n_split, tiles_per_split),
                in_specs=[
                    pl.BlockSpec((tile_rows, LANES), in_map),
                    pl.BlockSpec((tile_rows, LANES), in_map),
                ],
                out_specs=pl.BlockSpec((SUBLANES, LANES), lambda c, j: (c, 0)),
            ),
            compiler_params=pltpu.CompilerParams(
                dimension_semantics=("parallel", "arbitrary"),
                vmem_limit_bytes=VMEM_LIMIT_BYTES),
        )(x2, t2)

        total = total + jnp.sum(partials, dtype=jnp.float32)

    if n_bulk < n_elem:   # ragged tail (< 1024 elements): tiny jnp fold-in
        total = total + jnp.sum(
            _focal_elements(x_flat[n_bulk:], t_flat[n_bulk:], pos_weight, gamma),
            dtype=jnp.float32)

    return total / jnp.float32(n_elem)


def focal_loss_reference(inputs, targets, *, pos_weight=1.0, gamma=2.0):
    return jnp.mean(_focal_elements(inputs, targets, float(pos_weight), float(gamma)))


if __name__ == "__main__":
    key = jax.random.PRNGKey(0)
    k1, k2, k3, k4, k5, k6 = jax.random.split(key, 6)

    # Tolerance note: the kernel uses the approximate EUP reciprocal
    # (pl.reciprocal(..., approx=True), ~2^-12 per-element error), so compare
    # against the exact jnp reference with a slightly loosened tolerance.
    RTOL, ATOL = 2e-3, 2e-4

    # NCHW, small shapes: batch=2, channels=4, spatial=16x16 (aligned size).
    x = jax.random.normal(k1, (2, 4, 16, 16), dtype=jnp.float32)
    t = (jax.random.uniform(k2, (2, 4, 16, 16)) > 0.5).astype(jnp.float32)
    out = jax.block_until_ready(focal_loss(x, t, pos_weight=1.0, gamma=2.0))
    ref = focal_loss_reference(x, t, pos_weight=1.0, gamma=2.0)
    assert jnp.allclose(out, ref, rtol=RTOL, atol=ATOL), (out, ref)

    # Ragged size + pos_weight: exercises the in-kernel mask path and the
    # wrapper tail fold-in.
    xr = jax.random.normal(k3, (2, 4, 17, 17), dtype=jnp.float32)
    tr = (jax.random.uniform(k4, (2, 4, 17, 17)) > 0.5).astype(jnp.float32)
    out_r = jax.block_until_ready(focal_loss(xr, tr, pos_weight=2.0, gamma=2.0))
    ref_r = focal_loss_reference(xr, tr, pos_weight=2.0, gamma=2.0)
    assert jnp.allclose(out_r, ref_r, rtol=RTOL, atol=ATOL), (out_r, ref_r)

    # Medium size: exercises multi-tile accumulation across the inner grid axis.
    xm = jax.random.normal(k5, (2, 8, 128, 128), dtype=jnp.float32)
    tm = (jax.random.uniform(k6, (2, 8, 128, 128)) > 0.5).astype(jnp.float32)
    out_m = jax.block_until_ready(focal_loss(xm, tm, pos_weight=1.0, gamma=2.0))
    ref_m = focal_loss_reference(xm, tm, pos_weight=1.0, gamma=2.0)
    assert jnp.allclose(out_m, ref_m, rtol=RTOL, atol=ATOL), (out_m, ref_m)

    print("KERNEL_OK")
</pallas_src>

<mosaic_0001>
module attributes {stable_mosaic.version = 11 : i64} {
  func.func @_focal_sum_kernel(%arg0: i32, %arg1: i32, %arg2: memref<16x128xf32, #tpu.memory_space<vmem>>, %arg3: memref<16x128xf32, #tpu.memory_space<vmem>>, %arg4: memref<8x128xf32, #tpu.memory_space<vmem>>) attributes {dimension_semantics = [#tpu.dimension_semantics<parallel>, #tpu.dimension_semantics<arbitrary>], iteration_bounds = array<i64: 2, 1>, scalar_prefetch = 0 : i64, scratch_operands = 0 : i64, tpu.core_type = #tpu.core_type<tc>, window_params = [{transform_indices = @transform_0, window_bounds = array<i64: 16, 128>}, {transform_indices = @transform_1, window_bounds = array<i64: 16, 128>}, {transform_indices = @transform_2, window_bounds = array<i64: 8, 128>}]} {
    %c0_i32 = arith.constant 0 : i32
    %0 = arith.cmpi eq, %arg1, %c0_i32 : i32
    %1 = arith.extui %0 : i1 to i32
    %c0_i32_0 = arith.constant 0 : i32
    %2 = arith.cmpi ne, %1, %c0_i32_0 : i32
    scf.if %2 {
      %cst = arith.constant 0.000000e+00 : f32
      %13 = vector.broadcast %cst : f32 to vector<8x128xf32>
      %c0 = arith.constant 0 : index
      %c0_5 = arith.constant 0 : index
      %14 = vector.load %arg4[%c0, %c0_5] : memref<8x128xf32, #tpu.memory_space<vmem>>, vector<8x128xf32>
      tpu.vector_store %arg4[%c0, %c0_5], %13 {strides = array<i32>} : memref<8x128xf32, #tpu.memory_space<vmem>>, vector<8x128xf32>,
    } else {
    }
    %c1_i32 = arith.constant 1 : i32
    %3 = arith.muli %arg0, %c1_i32 : i32
    %4 = arith.addi %3, %arg1 : i32
    %c2048_i32 = arith.constant 2048 : i32
    %5 = arith.muli %4, %c2048_i32 : i32
    %c2048_i32_1 = arith.constant 2048 : i32
    %6 = arith.addi %5, %c2048_i32_1 : i32
    %c2048_i32_2 = arith.constant 2048 : i32
    %7 = arith.cmpi sle, %6, %c2048_i32_2 : i32
    %8 = arith.extui %7 : i1 to i32
    %c0_i32_3 = arith.constant 0 : i32
    %9 = arith.cmpi ne, %8, %c0_i32_3 : i32
    scf.if %9 {
      %c0_i32_5 = arith.constant 0 : i32
      %c16_i32 = arith.constant 16 : i32
      %13 = arith.muli %c0_i32_5, %c16_i32 : i32
      %14 = tpu.assume_multiple %13, 16 : i32
      %15 = arith.index_cast %14 : i32 to index
      %c0 = arith.constant 0 : index
      %16 = vector.load %arg2[%15, %c0] : memref<16x128xf32, #tpu.memory_space<vmem>>, vector<16x128xf32>
      %17 = arith.index_cast %14 : i32 to index
      %c0_6 = arith.constant 0 : index
      %18 = vector.load %arg3[%17, %c0_6] : memref<16x128xf32, #tpu.memory_space<vmem>>, vector<16x128xf32>
      %19 = math.absf %16 : vector<16x128xf32>
      %cst = arith.constant 0.000000e+00 : f32
      %20 = vector.broadcast %cst : f32 to vector<16x128xf32>
      %21 = arith.subf %20, %19 : vector<16x128xf32>
      %22 = math.exp %21 : vector<16x128xf32>
      %23 = math.log1p %22 : vector<16x128xf32>
      %cst_7 = arith.constant 0.000000e+00 : f32
      %24 = vector.broadcast %cst_7 : f32 to vector<16x128xf32>
      %25 = arith.subf %24, %16 : vector<16x128xf32>
      %cst_8 = arith.constant 0.000000e+00 : f32
      %26 = vector.broadcast %cst_8 : f32 to vector<16x128xf32>
      %27 = arith.maximumf %25, %26 : vector<16x128xf32>
      %28 = arith.addf %23, %27 : vector<16x128xf32>
      %cst_9 = arith.constant 1.000000e+00 : f32
      %29 = vector.broadcast %cst_9 : f32 to vector<16x128xf32>
      %30 = arith.subf %29, %18 : vector<16x128xf32>
      %31 = arith.mulf %30, %16 : vector<16x128xf32>
      %32 = arith.addf %31, %28 : vector<16x128xf32>
      %cst_10 = arith.constant 1.000000e+00 : f32
      %33 = vector.broadcast %cst_10 : f32 to vector<16x128xf32>
      %34 = arith.addf %33, %22 : vector<16x128xf32>
      %35 = tpu.reciprocal %34 {approx = true} : vector<16x128xf32> -> vector<16x128xf32>
      %cst_11 = arith.constant 0.000000e+00 : f32
      %36 = vector.broadcast %cst_11 : f32 to vector<16x128xf32>
      %37 = arith.cmpf oge, %16, %36 : vector<16x128xf32>
      %cst_12 = arith.constant 1.000000e+00 : f32
      %38 = vector.broadcast %cst_12 : f32 to vector<16x128xf32>
      %39 = arith.subf %38, %35 : vector<16x128xf32>
      %40 = arith.select %37, %35, %39 : vector<16x128xi1>, vector<16x128xf32>
      %41 = arith.addf %40, %18 : vector<16x128xf32>
      %cst_13 = arith.constant 2.000000e+00 : f32
      %42 = vector.broadcast %cst_13 : f32 to vector<16x128xf32>
      %43 = arith.mulf %42, %40 : vector<16x128xf32>
      %44 = arith.mulf %43, %18 : vector<16x128xf32>
      %45 = arith.subf %41, %44 : vector<16x128xf32>
      %46 = arith.mulf %45, %45 : vector<16x128xf32>
      %47 = arith.mulf %46, %32 : vector<16x128xf32>
      %c0_14 = arith.constant 0 : index
      %c0_15 = arith.constant 0 : index
      %48 = vector.load %arg4[%c0_14, %c0_15] : memref<8x128xf32, #tpu.memory_space<vmem>>, vector<8x128xf32>
      %49 = vector.shape_cast %47 : vector<16x128xf32> to vector<2x8x128xf32>
      %cst_16 = arith.constant dense<0.000000e+00> : vector<8x128xf32>
      %50 = vector.multi_reduction <add>, %49, %cst_16 [0] : vector<2x8x128xf32> to vector<8x128xf32>
      %51 = arith.addf %48, %50 : vector<8x128xf32>
      %c0_17 = arith.constant 0 : index
      %c0_18 = arith.constant 0 : index
      %52 = vector.load %arg4[%c0_17, %c0_18] : memref<8x128xf32, #tpu.memory_space<vmem>>, vector<8x128xf32>
      tpu.vector_store %arg4[%c0_17, %c0_18], %51 {strides = array<i32>} : memref<8x128xf32, #tpu.memory_space<vmem>>, vector<8x128xf32>,
      %c1_i32_19 = arith.constant 1 : i32
    } else {
    }
    %true = arith.constant true
    %10 = arith.xori %7, %true : i1
    %11 = arith.extui %10 : i1 to i32
    %c0_i32_4 = arith.constant 0 : i32
    %12 = arith.cmpi ne, %11, %c0_i32_4 : i32
    scf.if %12 {
      %13 = tpu.iota {dimensions = array<i32: 0>} : vector<16x128xi32>
      %14 = tpu.iota {dimensions = array<i32: 1>} : vector<16x128xi32>
      %c128_i32 = arith.constant 128 : i32
      %15 = vector.broadcast %c128_i32 : i32 to vector<16x128xi32>
      %16 = arith.muli %13, %15 : vector<16x128xi32>
      %17 = arith.addi %16, %14 : vector<16x128xi32>
      %c0_i32_5 = arith.constant 0 : i32
      %c16_i32 = arith.constant 16 : i32
      %18 = arith.muli %c0_i32_5, %c16_i32 : i32
      %19 = tpu.assume_multiple %18, 16 : i32
      %20 = arith.index_cast %19 : i32 to index
      %c0 = arith.constant 0 : index
      %21 = vector.load %arg2[%20, %c0] : memref<16x128xf32, #tpu.memory_space<vmem>>, vector<16x128xf32>
      %22 = arith.index_cast %19 : i32 to index
      %c0_6 = arith.constant 0 : index
      %23 = vector.load %arg3[%22, %c0_6] : memref<16x128xf32, #tpu.memory_space<vmem>>, vector<16x128xf32>
      %24 = math.absf %21 : vector<16x128xf32>
      %cst = arith.constant 0.000000e+00 : f32
      %25 = vector.broadcast %cst : f32 to vector<16x128xf32>
      %26 = arith.subf %25, %24 : vector<16x128xf32>
      %27 = math.exp %26 : vector<16x128xf32>
      %28 = math.log1p %27 : vector<16x128xf32>
      %cst_7 = arith.constant 0.000000e+00 : f32
      %29 = vector.broadcast %cst_7 : f32 to vector<16x128xf32>
      %30 = arith.subf %29, %21 : vector<16x128xf32>
      %cst_8 = arith.constant 0.000000e+00 : f32
      %31 = vector.broadcast %cst_8 : f32 to vector<16x128xf32>
      %32 = arith.maximumf %30, %31 : vector<16x128xf32>
      %33 = arith.addf %28, %32 : vector<16x128xf32>
      %cst_9 = arith.constant 1.000000e+00 : f32
      %34 = vector.broadcast %cst_9 : f32 to vector<16x128xf32>
      %35 = arith.subf %34, %23 : vector<16x128xf32>
      %36 = arith.mulf %35, %21 : vector<16x128xf32>
      %37 = arith.addf %36, %33 : vector<16x128xf32>
      %cst_10 = arith.constant 1.000000e+00 : f32
      %38 = vector.broadcast %cst_10 : f32 to vector<16x128xf32>
      %39 = arith.addf %38, %27 : vector<16x128xf32>
      %40 = tpu.reciprocal %39 {approx = true} : vector<16x128xf32> -> vector<16x128xf32>
      %cst_11 = arith.constant 0.000000e+00 : f32
      %41 = vector.broadcast %cst_11 : f32 to vector<16x128xf32>
      %42 = arith.cmpf oge, %21, %41 : vector<16x128xf32>
      %cst_12 = arith.constant 1.000000e+00 : f32
      %43 = vector.broadcast %cst_12 : f32 to vector<16x128xf32>
      %44 = arith.subf %43, %40 : vector<16x128xf32>
      %45 = arith.select %42, %40, %44 : vector<16x128xi1>, vector<16x128xf32>
      %46 = arith.addf %45, %23 : vector<16x128xf32>
      %cst_13 = arith.constant 2.000000e+00 : f32
      %47 = vector.broadcast %cst_13 : f32 to vector<16x128xf32>
      %48 = arith.mulf %47, %45 : vector<16x128xf32>
      %49 = arith.mulf %48, %23 : vector<16x128xf32>
      %50 = arith.subf %46, %49 : vector<16x128xf32>
      %51 = arith.mulf %50, %50 : vector<16x128xf32>
      %52 = arith.mulf %51, %37 : vector<16x128xf32>
      %c128_i32_14 = arith.constant 128 : i32
      %53 = arith.muli %19, %c128_i32_14 : i32
      %54 = arith.addi %5, %53 : i32
      %55 = vector.broadcast %54 : i32 to vector<16x128xi32>
      %56 = arith.addi %55, %17 : vector<16x128xi32>
      %c2048_i32_15 = arith.constant 2048 : i32
      %57 = vector.broadcast %c2048_i32_15 : i32 to vector<16x128xi32>
      %58 = arith.cmpi slt, %56, %57 : vector<16x128xi32>
      %cst_16 = arith.constant 0.000000e+00 : f32
      %59 = vector.broadcast %cst_16 : f32 to vector<16x128xf32>
      %60 = arith.select %58, %52, %59 : vector<16x128xi1>, vector<16x128xf32>
      %c0_17 = arith.constant 0 : index
      %c0_18 = arith.constant 0 : index
      %61 = vector.load %arg4[%c0_17, %c0_18] : memref<8x128xf32, #tpu.memory_space<vmem>>, vector<8x128xf32>
      %62 = vector.shape_cast %60 : vector<16x128xf32> to vector<2x8x128xf32>
      %cst_19 = arith.constant dense<0.000000e+00> : vector<8x128xf32>
      %63 = vector.multi_reduction <add>, %62, %cst_19 [0] : vector<2x8x128xf32> to vector<8x128xf32>
      %64 = arith.addf %61, %63 : vector<8x128xf32>
      %c0_20 = arith.constant 0 : index
      %c0_21 = arith.constant 0 : index
      %65 = vector.load %arg4[%c0_20, %c0_21] : memref<8x128xf32, #tpu.memory_space<vmem>>, vector<8x128xf32>
      tpu.vector_store %arg4[%c0_20, %c0_21], %64 {strides = array<i32>} : memref<8x128xf32, #tpu.memory_space<vmem>>, vector<8x128xf32>,
      %c1_i32_22 = arith.constant 1 : i32
    } else {
    }
    return
  }
  func.func @transform_0(%arg0: i32, %arg1: i32) -> (i32, i32) {
    %c1_i32 = arith.constant 1 : i32
    %0 = arith.muli %arg0, %c1_i32 : i32
    %1 = arith.addi %0, %arg1 : i32
    %c0_i32 = arith.constant 0 : i32
    %2 = arith.minsi %1, %c0_i32 : i32
    %c0_i32_0 = arith.constant 0 : i32
    %c0_i32_1 = arith.constant 0 : i32
    return %2, %c0_i32_0 : i32, i32
  }
  func.func @transform_1(%arg0: i32, %arg1: i32) -> (i32, i32) {
    %c1_i32 = arith.constant 1 : i32
    %0 = arith.muli %arg0, %c1_i32 : i32
    %1 = arith.addi %0, %arg1 : i32
    %c0_i32 = arith.constant 0 : i32
    %2 = arith.minsi %1, %c0_i32 : i32
    %c0_i32_0 = arith.constant 0 : i32
    %c0_i32_1 = arith.constant 0 : i32
    return %2, %c0_i32_0 : i32, i32
  }
  func.func @transform_2(%arg0: i32, %arg1: i32) -> (i32, i32) {
    %c0_i32 = arith.constant 0 : i32
    %c0_i32_0 = arith.constant 0 : i32
    return %arg0, %c0_i32 : i32, i32
  }
}

</mosaic_0001>

<llo_original>
// kernel: tpu_custom_call.1
$region0: #{tpu_custom_call.1}
  #allocation0 [shape = 'u32[]', space=smem, size = 0x4, offset = 0x4, fixed_abs, tag = 'smem constant byte address 0x4 - core index']
  #allocation1 [shape = 'u32[144,128]{1,0:T(1,128)}', space=vmem, size = 0x12000, scoped, tag = 'internal scratch']
  %s0 = inlined_call_operand.hbm [shape: f32[16,128], index: 0, kind: input, shape index: {}]
  %s1 = inlined_call_operand.hbm [shape: f32[16,128], index: 1, kind: input, shape index: {}]
  %s2 = inlined_call_operand.hbm [shape: f32[16,128], index: 2, kind: output, shape index: {}]
  %s3 = sld [smem:[#allocation0]]
  $region61: #{tpu_custom_call.1} parent=0
    _
  %s5 = ssub.s32 1, %s3
  %s6 = scalar_select 0, %s5, %s3
  $region1: #{tpu_custom_call.1} parent=0
    #allocation2 [shape = 'u8[16384]{0}', space=vmem, size = 0x4000, scoped, tag = 'input window, operand 0']
    #allocation3 [shape = 's32[2]{0}', space=sflag, size = 0x8, scoped, tag = 'scoped memory for tpu_custom_call.1']
    #allocation4 [shape = 's32[2]{0}', space=sflag, size = 0x8, scoped, tag = 'scoped memory for tpu_custom_call.1']
    #allocation5 [shape = 'u8[16384]{0}', space=vmem, size = 0x4000, scoped, tag = 'input window, operand 1']
    #allocation6 [shape = 's32[2]{0}', space=sflag, size = 0x8, scoped, tag = 'scoped memory for tpu_custom_call.1']
    #allocation7 [shape = 'u8[8192]{0}', space=vmem, size = 0x2000, scoped, tag = 'output window, operand 0']
    %7 = vsyncpa [#allocation3], 0
    %s8 = scalar_lea.sflag [#allocation3], 1
    %9 = vsyncpa %s8, 0
    %10 = vsyncpa [#allocation6], 0
    %s11 = scalar_lea.sflag [#allocation6], 1
    %12 = vsyncpa %s11, 0
    %13 = vsyncpa [#allocation4], 0
    %s14 = scalar_lea.sflag [#allocation4], 1
    %15 = vsyncpa %s14, 0
    loop: start=0, step=1, limit=4
    $region2: #{tpu_custom_call.1} parent=1 // loop_pre_header
      _
    $region3: #{tpu_custom_call.1} parent=1 // loop_header
      %s17 = sphi 0, %s21
      %p18 = scmp.ge.s32.totalorder %s17, 4
      %s24 = sphi 0, %s36
      %s25 = sphi 0, %s32
      %s26 = sphi 0, %s24
      %s27 = sphi 0, %s25
      %s28 = sphi 0, %s26
      %s29 = sphi 0, %s27
      %s45 = sphi 0, %s47
      %s48 = sphi 0, %s45
      %s49 = sphi 0, %s48
      %s65 = sphi 0, %s49
      %s77 = sphi 0, %s79
      %s80 = sphi 0, %s77
      %s81 = sphi 0, %s80
      %s97 = sphi 0, %s81
      %s103 = sphi 0, %s105
      %s106 = sphi 0, %s103
      %s107 = sphi 0, %s106
      %s123 = sphi 0, %s107
    $region4: #{tpu_custom_call.1} parent=1 // loop_header_branch
      %20 = sbr.rel (%p18) target = $region8
    $region5: #{tpu_custom_call.1} parent=1 // loop_body
      %s22 = ssub.s32 %s17, 1
      %s23 = ssub.s32 %s17, 2
      %s30 = sadd.s32 1, %s25
      %p31 = scmp.ge.s32.totalorder %s30, 1
      %s32 = scalar_select %p31, 0, %s30
      %s33 = sadd.s32 1, %s24
      %s34 = scalar_select %p31, %s33, %s24
      %p35 = scmp.ge.s32.totalorder %s34, 2
      %s36 = scalar_select %p35, 0, %s34
      %s37 = sadd.s32 %s24, %s25
      %p38 = scmp.lt.s32.totalorder %s37, 0
      %s39 = scalar_select %p38, %s37, 0
      %s40 = sadd.s32 %s36, %s32
      %p41 = scmp.lt.s32.totalorder %s40, 0
      %s42 = scalar_select %p41, %s40, 0
      %s43 = ssub.s32 %s39, %s42
      %p44 = scmp.eq.s32.totalorder %s43, 0
      %s46 = sadd.s32 %s45, 1
      %s47 = scalar_select %p44, %s45, %s46
      %p50 = pneg %p44
      %p51 = scmp.eq.s32.totalorder %s17, 1
      %p52 = por %p50, %p51
      %p53 = scmp.ne.s32.totalorder %s45, %s48
      %p54 = scmp.eq.s32.totalorder %s17, 0
      %p55 = por %p53, %p54
      %p56 = scmp.ne.s32.totalorder %s45, %s48
      %p57 = scmp.eq.s32.totalorder %s22, 1
      %p58 = por %p56, %p57
      %p59 = scmp.ne.s32.totalorder %s48, %s49
      %p60 = scmp.eq.s32.totalorder %s22, 0
      %p61 = por %p59, %p60
      %p62 = scmp.ne.s32.totalorder %s48, %s49
      %p63 = scmp.eq.s32.totalorder %s23, 1
      %p64 = por %p62, %p63
      %p66 = scmp.ne.s32.totalorder %s49, %s65
      %p67 = scmp.eq.s32.totalorder %s23, 0
      %p68 = por %p66, %p67
      %s69 = sadd.s32 %s24, %s25
      %p70 = scmp.lt.s32.totalorder %s69, 0
      %s71 = scalar_select %p70, %s69, 0
      %s72 = sadd.s32 %s36, %s32
      %p73 = scmp.lt.s32.totalorder %s72, 0
      %s74 = scalar_select %p73, %s72, 0
      %s75 = ssub.s32 %s71, %s74
      %p76 = scmp.eq.s32.totalorder %s75, 0
      %s78 = sadd.s32 %s77, 1
      %s79 = scalar_select %p76, %s77, %s78
      %p82 = pneg %p76
      %p83 = scmp.eq.s32.totalorder %s17, 1
      %p84 = por %p82, %p83
      %p85 = scmp.ne.s32.totalorder %s77, %s80
      %p86 = scmp.eq.s32.totalorder %s17, 0
      %p87 = por %p85, %p86
      %p88 = scmp.ne.s32.totalorder %s77, %s80
      %p89 = scmp.eq.s32.totalorder %s22, 1
      %p90 = por %p88, %p89
      %p91 = scmp.ne.s32.totalorder %s80, %s81
      %p92 = scmp.eq.s32.totalorder %s22, 0
      %p93 = por %p91, %p92
      %p94 = scmp.ne.s32.totalorder %s80, %s81
      %p95 = scmp.eq.s32.totalorder %s23, 1
      %p96 = por %p94, %p95
      %p98 = scmp.ne.s32.totalorder %s81, %s97
      %p99 = scmp.eq.s32.totalorder %s23, 0
      %p100 = por %p98, %p99
      %s101 = ssub.s32 %s24, %s36
      %p102 = scmp.eq.s32.totalorder %s101, 0
      %s104 = sadd.s32 %s103, 1
      %s105 = scalar_select %p102, %s103, %s104
      %p108 = pneg %p102
      %p109 = scmp.eq.s32.totalorder %s17, 1
      %p110 = por %p108, %p109
      %p111 = scmp.ne.s32.totalorder %s103, %s106
      %p112 = scmp.eq.s32.totalorder %s17, 0
      %p113 = por %p111, %p112
      %p114 = scmp.ne.s32.totalorder %s103, %s106
      %p115 = scmp.eq.s32.totalorder %s22, 1
      %p116 = por %p114, %p115
      %p117 = scmp.ne.s32.totalorder %s106, %s107
      %p118 = scmp.eq.s32.totalorder %s22, 0
      %p119 = por %p117, %p118
      %p120 = scmp.ne.s32.totalorder %s106, %s107
      %p121 = scmp.eq.s32.totalorder %s23, 1
      %p122 = por %p120, %p121
      %p124 = scmp.ne.s32.totalorder %s107, %s123
      %p125 = scmp.eq.s32.totalorder %s23, 0
      %p126 = por %p124, %p125
      %p127 = scmp.le.s32.totalorder 1, %s17
      %p128 = scmp.lt.s32.totalorder %s17, 3
      %p129 = pnand %p127, %p128
      %p130 = pneg %p129
      // Predicated region
      $region9: #{tpu_custom_call.1} parent=5 // pred_check
        _
      $region10: #{tpu_custom_call.1} parent=5 // pred_check_branch
        %132 = sbr.rel (%p129) target = $region12
      $region11: #{tpu_custom_call.1} parent=5 // pred_region
        %s133 = ssub.s32 %s17, 1
      $region12: #{tpu_custom_call.1} parent=5 // pred_fallthru
        _
      %p134 = scmp.lt.s32.totalorder %s17, 2
      // Predicated region
      $region13: #{tpu_custom_call.1} parent=5 // pred_check
        %p135 = pneg %p134
      $region14: #{tpu_custom_call.1} parent=5 // pred_check_branch
        %137 = sbr.rel (%p135) target = $region16
      $region15: #{tpu_custom_call.1} parent=5 // pred_region
        // Predicated region
        $region17: #{tpu_custom_call.1} parent=15 // pred_check
          %p138 = pneg %p55
        $region18: #{tpu_custom_call.1} parent=15 // pred_check_branch
          %140 = sbr.rel (%p138) target = $region20
        $region19: #{tpu_custom_call.1} parent=15 // pred_region
          %s141 = sand.u32 %s45, 1
          %s142 = scalar_lea.sflag [#allocation3], %s141
          %s143 = sand.u32 %s45, 1
          %s144 = smul.addr %s143, 16
          %s145 = scalar_lea.vmem [#allocation2], %s144
          %s146 = sadd.s32 %s24, %s25
          %p147 = scmp.lt.s32.totalorder %s146, 0
          %s148 = scalar_select %p147, %s146, 0
          %s149 = smul.u32 2, %s148
          %s151 = ssub.s32 256, 256
          %152 = vsyncadd %s142, %s151
          %s153 = smul.addr %s149, 128
          %s154 = scalar_lea.hbm %s0, %s153
          %s155 = sshll.u32 %s145, 4
          %s156 = int_to_ptr.vmem [resolvable:$true] %s155
          %161 = dma.hbm_to_vmem [thread:$0]  %s154, 256, %s156, %s142, 128, 128, 8
        $region20: #{tpu_custom_call.1} parent=15 // pred_fallthru
          _
        // Predicated region
        $region21: #{tpu_custom_call.1} parent=15 // pred_check
          %p162 = pneg %p87
        $region22: #{tpu_custom_call.1} parent=15 // pred_check_branch
          %164 = sbr.rel (%p162) target = $region24
        $region23: #{tpu_custom_call.1} parent=15 // pred_region
          %s165 = sand.u32 %s77, 1
          %s166 = scalar_lea.sflag [#allocation6], %s165
          %s167 = sand.u32 %s77, 1
          %s168 = smul.addr %s167, 16
          %s169 = scalar_lea.vmem [#allocation5], %s168
          %s170 = sadd.s32 %s24, %s25
          %p171 = scmp.lt.s32.totalorder %s170, 0
          %s172 = scalar_select %p171, %s170, 0
          %s173 = smul.u32 2, %s172
          %s175 = ssub.s32 256, 256
          %176 = vsyncadd %s166, %s175
          %s177 = smul.addr %s173, 128
          %s178 = scalar_lea.hbm %s1, %s177
          %s179 = sshll.u32 %s169, 4
          %s180 = int_to_ptr.vmem [resolvable:$true] %s179
          %185 = dma.hbm_to_vmem [thread:$0]  %s178, 256, %s180, %s166, 128, 128, 8
        $region24: #{tpu_custom_call.1} parent=15 // pred_fallthru
          _
      $region16: #{tpu_custom_call.1} parent=5 // pred_fallthru
        _
      %p186 = scmp.le.s32.totalorder 1, %s17
      %p187 = scmp.lt.s32.totalorder %s17, 3
      %p188 = pnand %p186, %p187
      %p189 = pneg %p188
      // Predicated region
      $region25: #{tpu_custom_call.1} parent=5 // pred_check
        _
      $region26: #{tpu_custom_call.1} parent=5 // pred_check_branch
        %191 = sbr.rel (%p188) target = $region28
      $region27: #{tpu_custom_call.1} parent=5 // pred_region
        %s192 = ssub.s32 %s17, 1
        %s193 = sand.u32 %s48, 1
        %s194 = scalar_lea.sflag [#allocation3], %s193
        %s195 = sand.u32 %s48, 1
        %s196 = smul.addr %s195, 16
        %s197 = scalar_lea.vmem [#allocation2], %s196
        // Predicated region
        $region29: #{tpu_custom_call.1} parent=27 // pred_check
          %p198 = pneg %p61
        $region30: #{tpu_custom_call.1} parent=27 // pred_check_branch
          %200 = sbr.rel (%p198) target = $region32
        $region31: #{tpu_custom_call.1} parent=27 // pred_region
          %201 = dma.done %s194, 256
        $region32: #{tpu_custom_call.1} parent=27 // pred_fallthru
          _
        %s202 = sand.u32 %s80, 1
        %s203 = scalar_lea.sflag [#allocation6], %s202
        %s204 = sand.u32 %s80, 1
        %s205 = smul.addr %s204, 16
        %s206 = scalar_lea.vmem [#allocation5], %s205
        // Predicated region
        $region33: #{tpu_custom_call.1} parent=27 // pred_check
          %p207 = pneg %p93
        $region34: #{tpu_custom_call.1} parent=27 // pred_check_branch
          %209 = sbr.rel (%p207) target = $region36
        $region35: #{tpu_custom_call.1} parent=27 // pred_region
          %210 = dma.done %s203, 256
        $region36: #{tpu_custom_call.1} parent=27 // pred_fallthru
          _
        %s211 = sand.u32 %s48, 1
        %s212 = scalar_lea.sflag [#allocation3], %s211
        %s213 = sand.u32 %s48, 1
        %s214 = smul.addr %s213, 16
        %s215 = scalar_lea.vmem [#allocation2], %s214
        %p216 = pneg %p61
        %p217 = pneg %p58
        %s218 = sand.u32 %s80, 1
        %s219 = scalar_lea.sflag [#allocation6], %s218
        %s220 = sand.u32 %s80, 1
        %s221 = smul.addr %s220, 16
        %s222 = scalar_lea.vmem [#allocation5], %s221
        %p223 = pneg %p93
        %p224 = pneg %p90
        %p225 = pneg %p119
        %p226 = pneg %p116
        %s227 = sand.u32 %s106, 1
        %s228 = scalar_lea.sflag [#allocation4], %s227
        %s229 = sand.u32 %s106, 1
        %s230 = smul.addr %s229, 8
        %s231 = scalar_lea.vmem [#allocation7], %s230
        %s232 = sadd.s32 %s26, %s27
        %p233 = scmp.lt.s32.totalorder %s232, 0
        %s234 = scalar_select %p233, %s232, 0
        %s235 = smul.u32 2, %s234
        %s236 = sadd.s32 %s26, %s27
        %p237 = scmp.lt.s32.totalorder %s236, 0
        %s238 = scalar_select %p237, %s236, 0
        %s239 = smul.u32 2, %s238
        %p240 = scmp.eq.s32.totalorder %s27, 0
        // Predicated region
        $region37: #{tpu_custom_call.1} parent=27 // pred_check
          %p241 = pneg %p240
        $region38: #{tpu_custom_call.1} parent=27 // pred_check_branch
          %243 = sbr.rel (%p241) target = $region40
        $region39: #{tpu_custom_call.1} parent=27 // pred_region
          %244 = vst [vmem:[%s231] sm:$0xff] 0.0
        $region40: #{tpu_custom_call.1} parent=27 // pred_fallthru
          _
        %s245 = sadd.s32 %s26, %s27
        %s246 = smul.u32 %s245, 2048
        %s247 = sadd.s32 %s246, 2048
        %p248 = scmp.le.s32.totalorder %s247, 2048
        // Predicated region
        $region41: #{tpu_custom_call.1} parent=27 // pred_check
          %p249 = pneg %p248
        $region42: #{tpu_custom_call.1} parent=27 // pred_check_branch
          %251 = sbr.rel (%p249) target = $region44
        $region43: #{tpu_custom_call.1} parent=27 // pred_region
          %v252 = vld [vmem:[%s197] sm:$0xff]
          %v253 = vld [vmem:[%s197 + $0x8] sm:$0xff]
          %v254 = vld [vmem:[%s206] sm:$0xff]
          %v255 = vld [vmem:[%s206 + $0x8] sm:$0xff]
          %v256 = vand.u32 2147483647, %v252
          %v257 = vand.u32 2147483647, %v253
          %v258 = vsub.f32 0.0, %v256
          %v259 = vsub.f32 0.0, %v257
          %v260 = vmul.f32 %v258, 1.442695
          %v261 = vpow.pop %v260
          %v262 = vmul.f32 %v259, 1.442695
          %v263 = vpow.pop %v262
          %v264 = vadd.f32 %v261, 1.0
          %v265 = vlog2.pop %v264
          %v266 = vmul.f32 %v265, 0.6931472
          %v267 = vmul.f32 -0.5, %v261
          %v268 = vadd.f32 %v267, 1.0
          %v269 = vmul.f32 %v268, %v261
          %v270 = vand.u32 2147483647, %v261
          %vm271 = vcmp.lt.f32.partialorder %v270, 0.0004427343
          %v272 = vsel %vm271, %v269, %v266
          %v273 = vadd.f32 %v263, 1.0
          %v274 = vlog2.pop %v273
          %v275 = vmul.f32 %v274, 0.6931472
          %v276 = vmul.f32 -0.5, %v263
          %v277 = vadd.f32 %v276, 1.0
          %v278 = vmul.f32 %v277, %v263
          %v279 = vand.u32 2147483647, %v263
          %vm280 = vcmp.lt.f32.partialorder %v279, 0.0004427343
          %v281 = vsel %vm280, %v278, %v275
          %v282 = vsub.f32 0.0, %v252
          %v283 = vsub.f32 0.0, %v253
          %v284 = vmax.f32 %v282, 0.0
          %v285 = vmax.f32 %v283, 0.0
          %v286 = vadd.f32 %v272, %v284
          %v287 = vadd.f32 %v281, %v285
          %v288 = vsub.f32 1.0, %v254
          %v289 = vsub.f32 1.0, %v255
          %v290 = vmul.f32 %v288, %v252
          %v291 = vmul.f32 %v289, %v253
          %v292 = vadd.f32 %v290, %v286
          %v293 = vadd.f32 %v291, %v287
          %v294 = vadd.f32 %v261, 1.0
          %v295 = vadd.f32 %v263, 1.0
          %v296 = vrcp.pop %v294
          %v297 = vrcp.pop %v295
          %vm298 = vcmp.ge.f32.partialorder %v252, 0.0
          %vm299 = vcmp.ge.f32.partialorder %v253, 0.0
          %v300 = vsub.f32 1.0, %v296
          %v301 = vsub.f32 1.0, %v297
          %v302 = vsel %vm298, %v296, %v300
          %v303 = vsel %vm299, %v297, %v301
          %v304 = vadd.f32 %v302, %v254
          %v305 = vadd.f32 %v303, %v255
          %v306 = vmul.f32 %v302, 2.0
          %v307 = vmul.f32 %v303, 2.0
          %v308 = vmul.f32 %v306, %v254
          %v309 = vmul.f32 %v307, %v255
          %v310 = vsub.f32 %v304, %v308
          %v311 = vsub.f32 %v305, %v309
          %v312 = vmul.f32 %v310, %v310
          %v313 = vmul.f32 %v311, %v311
          %v314 = vmul.f32 %v312, %v292
          %v315 = vmul.f32 %v313, %v293
          %v316 = vld [vmem:[%s231] sm:$0xff]
          %v317 = vadd.f32 %v314, %v315
          %v318 = vadd.f32 %v316, %v317
          %319 = vst [vmem:[%s231] sm:$0xff] %v318
        $region44: #{tpu_custom_call.1} parent=27 // pred_fallthru
          _
        %p320 = scmp.gt.s32.totalorder %s247, 2048
        // Predicated region
        $region45: #{tpu_custom_call.1} parent=27 // pred_check
          %p321 = pneg %p320
        $region46: #{tpu_custom_call.1} parent=27 // pred_check_branch
          %323 = sbr.rel (%p321) target = $region48
        $region47: #{tpu_custom_call.1} parent=27 // pred_region
          %v324 = vlaneseq
          %v325 = vshrl.u32 %v324, 7
          %v326 = vadd.s32 %v325, 8
          %v327 = vlaneseq
          %v328 = vand.u32 %v327, 127
          %v329 = vmul.u32 %v325, 128
          %v330 = vmul.u32 %v326, 128
          %v331 = vadd.s32 %v329, %v328
          %v332 = vadd.s32 %v330, %v328
          %v333 = vld [vmem:[%s197] sm:$0xff]
          %v334 = vld [vmem:[%s197 + $0x8] sm:$0xff]
          %v335 = vld [vmem:[%s206] sm:$0xff]
          %v336 = vld [vmem:[%s206 + $0x8] sm:$0xff]
          %v337 = vand.u32 2147483647, %v333
          %v338 = vand.u32 2147483647, %v334
          %v339 = vsub.f32 0.0, %v337
          %v340 = vsub.f32 0.0, %v338
          %v341 = vmul.f32 %v339, 1.442695
          %v342 = vpow.pop %v341
          %v343 = vmul.f32 %v340, 1.442695
          %v344 = vpow.pop %v343
          %v345 = vadd.f32 %v342, 1.0
          %v346 = vlog2.pop %v345
          %v347 = vmul.f32 %v346, 0.6931472
          %v348 = vmul.f32 -0.5, %v342
          %v349 = vadd.f32 %v348, 1.0
          %v350 = vmul.f32 %v349, %v342
          %v351 = vand.u32 2147483647, %v342
          %vm352 = vcmp.lt.f32.partialorder %v351, 0.0004427343
          %v353 = vsel %vm352, %v350, %v347
          %v354 = vadd.f32 %v344, 1.0
          %v355 = vlog2.pop %v354
          %v356 = vmul.f32 %v355, 0.6931472
          %v357 = vmul.f32 -0.5, %v344
          %v358 = vadd.f32 %v357, 1.0
          %v359 = vmul.f32 %v358, %v344
          %v360 = vand.u32 2147483647, %v344
          %vm361 = vcmp.lt.f32.partialorder %v360, 0.0004427343
          %v362 = vsel %vm361, %v359, %v356
          %v363 = vsub.f32 0.0, %v333
          %v364 = vsub.f32 0.0, %v334
          %v365 = vmax.f32 %v363, 0.0
          %v366 = vmax.f32 %v364, 0.0
          %v367 = vadd.f32 %v353, %v365
          %v368 = vadd.f32 %v362, %v366
          %v369 = vsub.f32 1.0, %v335
          %v370 = vsub.f32 1.0, %v336
          %v371 = vmul.f32 %v369, %v333
          %v372 = vmul.f32 %v370, %v334
          %v373 = vadd.f32 %v371, %v367
          %v374 = vadd.f32 %v372, %v368
          %v375 = vadd.f32 %v342, 1.0
          %v376 = vadd.f32 %v344, 1.0
          %v377 = vrcp.pop %v375
          %v378 = vrcp.pop %v376
          %vm379 = vcmp.ge.f32.partialorder %v333, 0.0
          %vm380 = vcmp.ge.f32.partialorder %v334, 0.0
          %v381 = vsub.f32 1.0, %v377
          %v382 = vsub.f32 1.0, %v378
          %v383 = vsel %vm379, %v377, %v381
          %v384 = vsel %vm380, %v378, %v382
          %v385 = vadd.f32 %v383, %v335
          %v386 = vadd.f32 %v384, %v336
          %v387 = vmul.f32 %v383, 2.0
          %v388 = vmul.f32 %v384, 2.0
          %v389 = vmul.f32 %v387, %v335
          %v390 = vmul.f32 %v388, %v336
          %v391 = vsub.f32 %v385, %v389
          %v392 = vsub.f32 %v386, %v390
          %v393 = vmul.f32 %v391, %v391
          %v394 = vmul.f32 %v392, %v392
          %v395 = vmul.f32 %v393, %v373
          %v396 = vmul.f32 %v394, %v374
          %s397 = smul.u32 0, 128
          %s398 = sadd.s32 %s246, %s397
          %v399 = vstv %s398
          %v400 = vadd.s32 %v399, %v331
          %v401 = vadd.s32 %v399, %v332
          %vm402 = vcmp.lt.s32.totalorder %v400, 2048
          %vm403 = vcmp.lt.s32.totalorder %v401, 2048
          %v404 = vsel %vm402, %v395, 0.0
          %v405 = vsel %vm403, %v396, 0.0
          %v406 = vld [vmem:[%s231] sm:$0xff]
          %v407 = vadd.f32 %v404, %v405
          %v408 = vadd.f32 %v406, %v407
          %409 = vst [vmem:[%s231] sm:$0xff] %v408
        $region48: #{tpu_custom_call.1} parent=27 // pred_fallthru
          _
        %s410 = sand.u32 %s106, 1
        %s411 = scalar_lea.sflag [#allocation4], %s410
        %s412 = sand.u32 %s106, 1
        %s413 = smul.addr %s412, 8
        %s414 = scalar_lea.vmem [#allocation7], %s413
        // Predicated region
        $region49: #{tpu_custom_call.1} parent=27 // pred_check
          %p415 = pneg %p116
        $region50: #{tpu_custom_call.1} parent=27 // pred_check_branch
          %417 = sbr.rel (%p415) target = $region52
        $region51: #{tpu_custom_call.1} parent=27 // pred_region
          %s419 = ssub.s32 128, 128
          %420 = vsyncadd %s411, %s419
          %s421 = smul.addr %s26, 128
          %s422 = scalar_lea.hbm %s2, %s421
          %s424 = sshll.u32 %s414, 4
          %s425 = int_to_ptr.vmem [resolvable:$true] %s424
          %427 = dma.vmem_to_hbm [thread:$0]  %s425, 128, %s422, %s411
        $region52: #{tpu_custom_call.1} parent=27 // pred_fallthru
          _
      $region28: #{tpu_custom_call.1} parent=5 // pred_fallthru
        _
      %p428 = scmp.le.s32.totalorder 2, %s17
      // Predicated region
      $region53: #{tpu_custom_call.1} parent=5 // pred_check
        %p429 = pneg %p428
      $region54: #{tpu_custom_call.1} parent=5 // pred_check_branch
        %431 = sbr.rel (%p429) target = $region56
      $region55: #{tpu_custom_call.1} parent=5 // pred_region
        %s432 = ssub.s32 %s17, 2
        // Predicated region
        $region57: #{tpu_custom_call.1} parent=55 // pred_check
          %p433 = pneg %p122
        $region58: #{tpu_custom_call.1} parent=55 // pred_check_branch
          %435 = sbr.rel (%p433) target = $region60
        $region59: #{tpu_custom_call.1} parent=55 // pred_region
          %s436 = sand.u32 %s107, 1
          %s437 = scalar_lea.sflag [#allocation4], %s436
          %s438 = sand.u32 %s107, 1
          %s439 = smul.addr %s438, 8
          %s440 = scalar_lea.vmem [#allocation7], %s439
          %441 = dma.done %s437, 128
        $region60: #{tpu_custom_call.1} parent=55 // pred_fallthru
          _
      $region56: #{tpu_custom_call.1} parent=5 // pred_fallthru
        _
    $region6: #{tpu_custom_call.1} parent=1 // loop_footer
      %s21 = sadd.s32 1, %s17
    $region7: #{tpu_custom_call.1} parent=1 // loop_footer_branch
      %16 = sbr.rel target = $region3
    $region8: #{tpu_custom_call.1} parent=1 // loop_exit
      _
    %442 = vsyncpa [#allocation3], 1
    %s443 = scalar_lea.sflag [#allocation3], 1
    %444 = vsyncpa %s443, 1
    %445 = vsyncpa [#allocation6], 1
    %s446 = scalar_lea.sflag [#allocation6], 1
    %447 = vsyncpa %s446, 1
    %448 = vsyncpa [#allocation4], 1
    %s449 = scalar_lea.sflag [#allocation4], 1
    %450 = vsyncpa %s449, 1

</llo_original>
